<compile_context>
chip_gen: v6e
topology: v6e:2x2x1
jax: 0.10.0
libtpu: 0.0.40
codegen_flags: <defaults>
</compile_context>

<pallas_src>
import jax
import jax.numpy as jnp
from jax.experimental import pallas as pl
from jax.experimental.pallas import tpu as pltpu


def rnn_kernel(x_ref, wih_ref, bih_ref, bhh_ref, whh_ref, who_ref, bho_ref,
               out_ref, hist_ref):
    """Whole-sequence RNN forward in one invocation.

    x_ref:    (T, Lp) zero-padded input sequence (VMEM)
    w*/b*:    pre-transposed, zero-padded weights so the kernel computes
              x @ W + b (VMEM)
    out_ref:  (T, Lp) output slab, written once, lane-dense (VMEM)
    hist_ref: (T, Hp) VMEM scratch; holds the hoisted input projection, whose
              rows are overwritten in-place by each step's hidden state.
    """
    T = x_ref.shape[0]
    Hp = whh_ref.shape[0]

    # Hoisted input projection with BOTH biases folded in (removes the per-step
    # `+ b_hh` from the serial chain).  One lane-dense (T, Hp) store.
    bias = bih_ref[...] + bhh_ref[...]
    hist_ref[...] = (jnp.dot(x_ref[...], wih_ref[...],
                             preferred_element_type=jnp.float32) + bias)
    # TODO(synk): since x is one-hot in this use case, ih could be T row-reads
    # of W_ih via scalar-prefetched indices instead of a matmul; kept general.

    whh = whh_ref[...]

    # Serial recurrence — only the (1,Hp)@(Hp,Hp) matmul + tanh stays on the
    # latency chain.  T is static & small, so this Python loop is fully
    # unrolled straight-line code the scheduler can see through.
    # TODO(synk): for large T switch to lax.fori_loop(..., unroll=4..8); a
    # hand-tuned variant could pin W_hh in the MXU via pltpu.matmul_push_rhs.
    h = jnp.zeros((1, Hp), jnp.float32)
    for t in range(T):
        h = jnp.tanh(hist_ref[t:t + 1, :]
                     + jnp.dot(h, whh, preferred_element_type=jnp.float32))
        hist_ref[t:t + 1, :] = h  # overwrite the consumed ih row with h_t

    # Hoisted output projection: one (T, Hp) @ (Hp, Lp) matmul and a single
    # lane-dense (T, Lp) store.
    out_ref[...] = (jnp.dot(hist_ref[...], who_ref[...],
                            preferred_element_type=jnp.float32) + bho_ref[...])


def _round_up(n, m):
    return ((n + m - 1) // m) * m


def rnn_forward(x, params):
    """x: (T, L) float32.  Returns (T, L) float32 outputs, matching the PyTorch forward."""
    T, L = x.shape
    wih, bih, whh, bhh, who, bho = params
    H = whh.shape[0]

    # Pad the feature dims to the 128-lane width so all kernel stores are
    # unmasked full-lane vst's.  Zero padding keeps padded hidden lanes at 0.
    Lp = _round_up(L, 128)
    Hp = _round_up(H, 128)

    def pad2(a, rows, cols):
        return jnp.pad(a, ((0, rows - a.shape[0]), (0, cols - a.shape[1])))

    xp = pad2(x, T, Lp)
    wihp = pad2(wih, Lp, Hp)
    bihp = pad2(bih, 1, Hp)
    whhp = pad2(whh, Hp, Hp)
    bhhp = pad2(bhh, 1, Hp)
    whop = pad2(who, Hp, Lp)
    bhop = pad2(bho, 1, Lp)

    vmem = pl.BlockSpec(memory_space=pltpu.MemorySpace.VMEM)
    out = pl.pallas_call(
        rnn_kernel,
        out_shape=jax.ShapeDtypeStruct((T, Lp), jnp.float32),
        in_specs=[vmem] * 7,
        out_specs=vmem,
        scratch_shapes=[pltpu.VMEM((T, Hp), jnp.float32)],
    )(xp, wihp, bihp, bhhp, whhp, whop, bhop)

    return out[:, :L]


def init_params(key, hidden_size, one_hot_length):
    """Deterministic parameter init mirroring the module shapes.
    PyTorch stores Linear weights as (out, in); we pre-transpose to (in, out)
    so the kernel computes x @ W + b.  Xavier-normal on weights."""
    H, L = hidden_size, one_hot_length
    k1, k2, k3, k4, k5, k6 = jax.random.split(key, 6)

    def xavier(k, fan_in, fan_out):
        std = (2.0 / (fan_in + fan_out)) ** 0.5
        # sample in (out, in) like torch, then transpose to (in, out)
        return (std * jax.random.normal(k, (fan_out, fan_in), jnp.float32)).T

    wih = xavier(k1, L, H)                                            # (L, H)
    whh = xavier(k2, H, H)                                            # (H, H)
    who = xavier(k3, H, L)                                            # (H, L)
    bih = jax.random.uniform(k4, (1, H), jnp.float32, -1.0 / L**0.5, 1.0 / L**0.5)
    bhh = jax.random.uniform(k5, (1, H), jnp.float32, -1.0 / H**0.5, 1.0 / H**0.5)
    bho = jax.random.uniform(k6, (1, L), jnp.float32, -1.0 / H**0.5, 1.0 / H**0.5)
    return (wih, bih, whh, bhh, who, bho)


def rnn_reference(x, params):
    """Pure-JAX reference of the PyTorch forward for validation."""
    wih, bih, whh, bhh, who, bho = params
    H = whh.shape[0]

    def step(h, x_t):
        h_new = jnp.tanh(x_t[None, :] @ wih + bih + h @ whh + bhh)
        o = h_new @ who + bho
        return h_new, o[0]

    h0 = jnp.zeros((1, H), jnp.float32)
    _, outs = jax.lax.scan(step, h0, x)
    return outs


if __name__ == "__main__":
    hidden_size = 32
    one_hot_length = 64
    seq_len = 8

    key = jax.random.PRNGKey(0)
    kp, kx = jax.random.split(key)
    params = init_params(kp, hidden_size, one_hot_length)

    # one-hot input sequence, (T, L), matching the module's expected input
    idx = jax.random.randint(kx, (seq_len,), 0, one_hot_length)
    x = jax.nn.one_hot(idx, one_hot_length, dtype=jnp.float32)

    out = rnn_forward(x, params)
    out = jax.block_until_ready(out)

    ref = rnn_reference(x, params)
    assert out.shape == (seq_len, one_hot_length)
    assert jnp.allclose(out, ref, atol=1e-5, rtol=1e-5), "mismatch vs reference"

    print("KERNEL_OK")
</pallas_src>

<mosaic_0001>
module attributes {stable_mosaic.version = 11 : i64} {
  func.func @rnn_kernel(%arg0: memref<8x128xf32, #tpu.memory_space<vmem>>, %arg1: memref<128x128xf32, #tpu.memory_space<vmem>>, %arg2: memref<1x128xf32, #tpu.memory_space<vmem>>, %arg3: memref<1x128xf32, #tpu.memory_space<vmem>>, %arg4: memref<128x128xf32, #tpu.memory_space<vmem>>, %arg5: memref<128x128xf32, #tpu.memory_space<vmem>>, %arg6: memref<1x128xf32, #tpu.memory_space<vmem>>, %arg7: memref<8x128xf32, #tpu.memory_space<vmem>>, %arg8: memref<8x128xf32, #tpu.memory_space<vmem>>) attributes {dimension_semantics = [], scalar_prefetch = 0 : i64, scratch_operands = 1 : i64, tpu.core_type = #tpu.core_type<tc>} {
    %c0 = arith.constant 0 : index
    %c0_0 = arith.constant 0 : index
    %0 = vector.load %arg2[%c0, %c0_0] : memref<1x128xf32, #tpu.memory_space<vmem>>, vector<1x128xf32>
    %c0_1 = arith.constant 0 : index
    %c0_2 = arith.constant 0 : index
    %1 = vector.load %arg3[%c0_1, %c0_2] : memref<1x128xf32, #tpu.memory_space<vmem>>, vector<1x128xf32>
    %2 = arith.addf %0, %1 : vector<1x128xf32>
    %c0_3 = arith.constant 0 : index
    %c0_4 = arith.constant 0 : index
    %3 = vector.load %arg0[%c0_3, %c0_4] : memref<8x128xf32, #tpu.memory_space<vmem>>, vector<8x128xf32>
    %c0_5 = arith.constant 0 : index
    %c0_6 = arith.constant 0 : index
    %4 = vector.load %arg1[%c0_5, %c0_6] : memref<128x128xf32, #tpu.memory_space<vmem>>, vector<128x128xf32>
    %cst = arith.constant dense<0.000000e+00> : vector<8x128xf32>
    %5 = tpu.matmul %3, %4, %cst {dimension_numbers = #tpu.dot_dimension_numbers<[1], [0], [0], [1], [0, 0, 1, 1], [], []>} : vector<8x128xf32>, vector<128x128xf32>, vector<8x128xf32> -> vector<8x128xf32>
    %6 = vector.broadcast %2 : vector<1x128xf32> to vector<8x128xf32>
    %7 = arith.addf %5, %6 : vector<8x128xf32>
    %c0_7 = arith.constant 0 : index
    %c0_8 = arith.constant 0 : index
    %8 = vector.load %arg8[%c0_7, %c0_8] : memref<8x128xf32, #tpu.memory_space<vmem>>, vector<8x128xf32>
    tpu.vector_store %arg8[%c0_7, %c0_8], %7 {strides = array<i32>} : memref<8x128xf32, #tpu.memory_space<vmem>>, vector<8x128xf32>,
    %c0_9 = arith.constant 0 : index
    %c0_10 = arith.constant 0 : index
    %9 = vector.load %arg4[%c0_9, %c0_10] : memref<128x128xf32, #tpu.memory_space<vmem>>, vector<128x128xf32>
    %cst_11 = arith.constant 0.000000e+00 : f32
    %10 = vector.broadcast %cst_11 : f32 to vector<1x128xf32>
    %c0_12 = arith.constant 0 : index
    %c0_13 = arith.constant 0 : index
    %11 = vector.load %arg8[%c0_12, %c0_13] : memref<8x128xf32, #tpu.memory_space<vmem>>, vector<1x128xf32>
    %cst_14 = arith.constant dense<0.000000e+00> : vector<1x128xf32>
    %12 = tpu.matmul %10, %9, %cst_14 {dimension_numbers = #tpu.dot_dimension_numbers<[1], [0], [0], [1], [0, 0, 1, 1], [], []>} : vector<1x128xf32>, vector<128x128xf32>, vector<1x128xf32> -> vector<1x128xf32>
    %13 = arith.addf %11, %12 : vector<1x128xf32>
    %14 = math.tanh %13 : vector<1x128xf32>
    %c0_15 = arith.constant 0 : index
    %c0_16 = arith.constant 0 : index
    %15 = vector.load %arg8[%c0_15, %c0_16] : memref<8x128xf32, #tpu.memory_space<vmem>>, vector<1x128xf32>
    tpu.vector_store %arg8[%c0_15, %c0_16], %14 {strides = array<i32>} : memref<8x128xf32, #tpu.memory_space<vmem>>, vector<1x128xf32>,
    %c1 = arith.constant 1 : index
    %c0_17 = arith.constant 0 : index
    %16 = vector.load %arg8[%c1, %c0_17] : memref<8x128xf32, #tpu.memory_space<vmem>>, vector<1x128xf32>
    %cst_18 = arith.constant dense<0.000000e+00> : vector<1x128xf32>
    %17 = tpu.matmul %14, %9, %cst_18 {dimension_numbers = #tpu.dot_dimension_numbers<[1], [0], [0], [1], [0, 0, 1, 1], [], []>} : vector<1x128xf32>, vector<128x128xf32>, vector<1x128xf32> -> vector<1x128xf32>
    %18 = arith.addf %16, %17 : vector<1x128xf32>
    %19 = math.tanh %18 : vector<1x128xf32>
    %c1_19 = arith.constant 1 : index
    %c0_20 = arith.constant 0 : index
    %20 = vector.load %arg8[%c1_19, %c0_20] : memref<8x128xf32, #tpu.memory_space<vmem>>, vector<1x128xf32>
    tpu.vector_store %arg8[%c1_19, %c0_20], %19 {strides = array<i32>} : memref<8x128xf32, #tpu.memory_space<vmem>>, vector<1x128xf32>,
    %c2 = arith.constant 2 : index
    %c0_21 = arith.constant 0 : index
    %21 = vector.load %arg8[%c2, %c0_21] : memref<8x128xf32, #tpu.memory_space<vmem>>, vector<1x128xf32>
    %cst_22 = arith.constant dense<0.000000e+00> : vector<1x128xf32>
    %22 = tpu.matmul %19, %9, %cst_22 {dimension_numbers = #tpu.dot_dimension_numbers<[1], [0], [0], [1], [0, 0, 1, 1], [], []>} : vector<1x128xf32>, vector<128x128xf32>, vector<1x128xf32> -> vector<1x128xf32>
    %23 = arith.addf %21, %22 : vector<1x128xf32>
    %24 = math.tanh %23 : vector<1x128xf32>
    %c2_23 = arith.constant 2 : index
    %c0_24 = arith.constant 0 : index
    %25 = vector.load %arg8[%c2_23, %c0_24] : memref<8x128xf32, #tpu.memory_space<vmem>>, vector<1x128xf32>
    tpu.vector_store %arg8[%c2_23, %c0_24], %24 {strides = array<i32>} : memref<8x128xf32, #tpu.memory_space<vmem>>, vector<1x128xf32>,
    %c3 = arith.constant 3 : index
    %c0_25 = arith.constant 0 : index
    %26 = vector.load %arg8[%c3, %c0_25] : memref<8x128xf32, #tpu.memory_space<vmem>>, vector<1x128xf32>
    %cst_26 = arith.constant dense<0.000000e+00> : vector<1x128xf32>
    %27 = tpu.matmul %24, %9, %cst_26 {dimension_numbers = #tpu.dot_dimension_numbers<[1], [0], [0], [1], [0, 0, 1, 1], [], []>} : vector<1x128xf32>, vector<128x128xf32>, vector<1x128xf32> -> vector<1x128xf32>
    %28 = arith.addf %26, %27 : vector<1x128xf32>
    %29 = math.tanh %28 : vector<1x128xf32>
    %c3_27 = arith.constant 3 : index
    %c0_28 = arith.constant 0 : index
    %30 = vector.load %arg8[%c3_27, %c0_28] : memref<8x128xf32, #tpu.memory_space<vmem>>, vector<1x128xf32>
    tpu.vector_store %arg8[%c3_27, %c0_28], %29 {strides = array<i32>} : memref<8x128xf32, #tpu.memory_space<vmem>>, vector<1x128xf32>,
    %c4 = arith.constant 4 : index
    %c0_29 = arith.constant 0 : index
    %31 = vector.load %arg8[%c4, %c0_29] : memref<8x128xf32, #tpu.memory_space<vmem>>, vector<1x128xf32>
    %cst_30 = arith.constant dense<0.000000e+00> : vector<1x128xf32>
    %32 = tpu.matmul %29, %9, %cst_30 {dimension_numbers = #tpu.dot_dimension_numbers<[1], [0], [0], [1], [0, 0, 1, 1], [], []>} : vector<1x128xf32>, vector<128x128xf32>, vector<1x128xf32> -> vector<1x128xf32>
    %33 = arith.addf %31, %32 : vector<1x128xf32>
    %34 = math.tanh %33 : vector<1x128xf32>
    %c4_31 = arith.constant 4 : index
    %c0_32 = arith.constant 0 : index
    %35 = vector.load %arg8[%c4_31, %c0_32] : memref<8x128xf32, #tpu.memory_space<vmem>>, vector<1x128xf32>
    tpu.vector_store %arg8[%c4_31, %c0_32], %34 {strides = array<i32>} : memref<8x128xf32, #tpu.memory_space<vmem>>, vector<1x128xf32>,
    %c5 = arith.constant 5 : index
    %c0_33 = arith.constant 0 : index
    %36 = vector.load %arg8[%c5, %c0_33] : memref<8x128xf32, #tpu.memory_space<vmem>>, vector<1x128xf32>
    %cst_34 = arith.constant dense<0.000000e+00> : vector<1x128xf32>
    %37 = tpu.matmul %34, %9, %cst_34 {dimension_numbers = #tpu.dot_dimension_numbers<[1], [0], [0], [1], [0, 0, 1, 1], [], []>} : vector<1x128xf32>, vector<128x128xf32>, vector<1x128xf32> -> vector<1x128xf32>
    %38 = arith.addf %36, %37 : vector<1x128xf32>
    %39 = math.tanh %38 : vector<1x128xf32>
    %c5_35 = arith.constant 5 : index
    %c0_36 = arith.constant 0 : index
    %40 = vector.load %arg8[%c5_35, %c0_36] : memref<8x128xf32, #tpu.memory_space<vmem>>, vector<1x128xf32>
    tpu.vector_store %arg8[%c5_35, %c0_36], %39 {strides = array<i32>} : memref<8x128xf32, #tpu.memory_space<vmem>>, vector<1x128xf32>,
    %c6 = arith.constant 6 : index
    %c0_37 = arith.constant 0 : index
    %41 = vector.load %arg8[%c6, %c0_37] : memref<8x128xf32, #tpu.memory_space<vmem>>, vector<1x128xf32>
    %cst_38 = arith.constant dense<0.000000e+00> : vector<1x128xf32>
    %42 = tpu.matmul %39, %9, %cst_38 {dimension_numbers = #tpu.dot_dimension_numbers<[1], [0], [0], [1], [0, 0, 1, 1], [], []>} : vector<1x128xf32>, vector<128x128xf32>, vector<1x128xf32> -> vector<1x128xf32>
    %43 = arith.addf %41, %42 : vector<1x128xf32>
    %44 = math.tanh %43 : vector<1x128xf32>
    %c6_39 = arith.constant 6 : index
    %c0_40 = arith.constant 0 : index
    %45 = vector.load %arg8[%c6_39, %c0_40] : memref<8x128xf32, #tpu.memory_space<vmem>>, vector<1x128xf32>
    tpu.vector_store %arg8[%c6_39, %c0_40], %44 {strides = array<i32>} : memref<8x128xf32, #tpu.memory_space<vmem>>, vector<1x128xf32>,
    %c7 = arith.constant 7 : index
    %c0_41 = arith.constant 0 : index
    %46 = vector.load %arg8[%c7, %c0_41] : memref<8x128xf32, #tpu.memory_space<vmem>>, vector<1x128xf32>
    %cst_42 = arith.constant dense<0.000000e+00> : vector<1x128xf32>
    %47 = tpu.matmul %44, %9, %cst_42 {dimension_numbers = #tpu.dot_dimension_numbers<[1], [0], [0], [1], [0, 0, 1, 1], [], []>} : vector<1x128xf32>, vector<128x128xf32>, vector<1x128xf32> -> vector<1x128xf32>
    %48 = arith.addf %46, %47 : vector<1x128xf32>
    %49 = math.tanh %48 : vector<1x128xf32>
    %c7_43 = arith.constant 7 : index
    %c0_44 = arith.constant 0 : index
    %50 = vector.load %arg8[%c7_43, %c0_44] : memref<8x128xf32, #tpu.memory_space<vmem>>, vector<1x128xf32>
    tpu.vector_store %arg8[%c7_43, %c0_44], %49 {strides = array<i32>} : memref<8x128xf32, #tpu.memory_space<vmem>>, vector<1x128xf32>,
    %c0_45 = arith.constant 0 : index
    %c0_46 = arith.constant 0 : index
    %51 = vector.load %arg8[%c0_45, %c0_46] : memref<8x128xf32, #tpu.memory_space<vmem>>, vector<8x128xf32>
    %c0_47 = arith.constant 0 : index
    %c0_48 = arith.constant 0 : index
    %52 = vector.load %arg5[%c0_47, %c0_48] : memref<128x128xf32, #tpu.memory_space<vmem>>, vector<128x128xf32>
    %cst_49 = arith.constant dense<0.000000e+00> : vector<8x128xf32>
    %53 = tpu.matmul %51, %52, %cst_49 {dimension_numbers = #tpu.dot_dimension_numbers<[1], [0], [0], [1], [0, 0, 1, 1], [], []>} : vector<8x128xf32>, vector<128x128xf32>, vector<8x128xf32> -> vector<8x128xf32>
    %c0_50 = arith.constant 0 : index
    %c0_51 = arith.constant 0 : index
    %54 = vector.load %arg6[%c0_50, %c0_51] : memref<1x128xf32, #tpu.memory_space<vmem>>, vector<1x128xf32>
    %55 = vector.broadcast %54 : vector<1x128xf32> to vector<8x128xf32>
    %56 = arith.addf %53, %55 : vector<8x128xf32>
    %c0_52 = arith.constant 0 : index
    %c0_53 = arith.constant 0 : index
    %57 = vector.load %arg7[%c0_52, %c0_53] : memref<8x128xf32, #tpu.memory_space<vmem>>, vector<8x128xf32>
    tpu.vector_store %arg7[%c0_52, %c0_53], %56 {strides = array<i32>} : memref<8x128xf32, #tpu.memory_space<vmem>>, vector<8x128xf32>,
    return
  }
}

</mosaic_0001>

<llo_original>
// kernel: tpu_custom_call.1
$region0: #{tpu_custom_call.1}
  #allocation0 [shape = 'u32[]', space=smem, size = 0x4, offset = 0x4, fixed_abs, tag = 'smem constant byte address 0x4 - core index']
  #allocation1 [shape = 'u32[144,128]{1,0:T(1,128)}', space=vmem, size = 0x12000, scoped, tag = 'internal scratch']
  #allocation2 [shape = 'f32[8,128]{1,0:T(8,128)}', space=vmem, size = 0x1000, scoped, tag = 'scratch operand']
  %s0 = inlined_call_operand.hbm [shape: f32[8,128], index: 0, kind: input, shape index: {}]
  %s1 = inlined_call_operand.hbm [shape: f32[128,128], index: 1, kind: input, shape index: {}]
  %s2 = inlined_call_operand.vmem [shape: f32[1,128], index: 2, kind: input, shape index: {}]
  %s3 = inlined_call_operand.vmem [shape: f32[1,128], index: 3, kind: input, shape index: {}]
  %s4 = inlined_call_operand.hbm [shape: f32[128,128], index: 4, kind: input, shape index: {}]
  %s5 = inlined_call_operand.hbm [shape: f32[128,128], index: 5, kind: input, shape index: {}]
  %s6 = inlined_call_operand.vmem [shape: f32[1,128], index: 6, kind: input, shape index: {}]
  %s7 = inlined_call_operand.hbm [shape: f32[8,128], index: 7, kind: output, shape index: {}]
  %s8 = sld [smem:[#allocation0]]
  $region54: #{tpu_custom_call.1} parent=0
    _
  %s10 = ssub.s32 1, %s8
  %s11 = scalar_select 0, %s10, %s8
  $region1: #{tpu_custom_call.1} parent=0
    #allocation3 [shape = 'u8[4096]{0}', space=vmem, size = 0x1000, scoped, tag = 'input window, operand 0, single buffered']
    #allocation4 [shape = 's32[1]{0}', space=sflag, size = 0x4, scoped, tag = 'scoped memory for tpu_custom_call.1']
    #allocation5 [shape = 's32[1]{0}', space=sflag, size = 0x4, scoped, tag = 'scoped memory for tpu_custom_call.1']
    #allocation6 [shape = 'u8[65536]{0}', space=vmem, size = 0x10000, scoped, tag = 'input window, operand 1, single buffered']
    #allocation7 [shape = 's32[1]{0}', space=sflag, size = 0x4, scoped, tag = 'scoped memory for tpu_custom_call.1']
    #allocation8 [shape = 'u8[65536]{0}', space=vmem, size = 0x10000, scoped, tag = 'input window, operand 4, single buffered']
    #allocation9 [shape = 'u8[65536]{0}', space=vmem, size = 0x10000, scoped, tag = 'input window, operand 5, single buffered']
    #allocation10 [shape = 's32[1]{0}', space=sflag, size = 0x4, scoped, tag = 'scoped memory for tpu_custom_call.1']
    #allocation11 [shape = 'u8[4096]{0}', space=vmem, size = 0x1000, scoped, tag = 'output window, operand 0, single buffered']
    %12 = vsyncpa [#allocation4], 0
    %13 = vsyncpa [#allocation7], 0
    %14 = vsyncpa [#allocation10], 0
    %15 = vsyncpa [#allocation5], 0
    // Predicated region
    $region2: #{tpu_custom_call.1} parent=1 // pred_check
      _
    $region3: #{tpu_custom_call.1} parent=1 // pred_check_branch
      %17 = sbr.rel (0) target = $region5
    $region4: #{tpu_custom_call.1} parent=1 // pred_region
      %s19 = ssub.s32 128, 128
      %20 = vsyncadd [#allocation4], %s19
      %s22 = sshll.u32 [#allocation3], 4
      %s23 = int_to_ptr.vmem [resolvable:$true] %s22
      %25 = dma.hbm_to_vmem [thread:$0]  %s0, 128, %s23, [#allocation4]
    $region5: #{tpu_custom_call.1} parent=1 // pred_fallthru
      _
    // Predicated region
    $region6: #{tpu_custom_call.1} parent=1 // pred_check
      _
    $region7: #{tpu_custom_call.1} parent=1 // pred_check_branch
      %27 = sbr.rel (0) target = $region9
    $region8: #{tpu_custom_call.1} parent=1 // pred_region
      %s29 = ssub.s32 2048, 2048
      %30 = vsyncadd [#allocation7], %s29
      %s31 = sshll.u32 [#allocation6], 4
      %s32 = int_to_ptr.vmem [resolvable:$true] %s31
      %37 = dma.hbm_to_vmem [thread:$0]  %s1, 2048, %s32, [#allocation7], 128, 128, 8
    $region9: #{tpu_custom_call.1} parent=1 // pred_fallthru
      _
    // Predicated region
    $region10: #{tpu_custom_call.1} parent=1 // pred_check
      _
    $region11: #{tpu_custom_call.1} parent=1 // pred_check_branch
      %39 = sbr.rel (0) target = $region13
    $region12: #{tpu_custom_call.1} parent=1 // pred_region
      _
    $region13: #{tpu_custom_call.1} parent=1 // pred_fallthru
      _
    // Predicated region
    $region14: #{tpu_custom_call.1} parent=1 // pred_check
      _
    $region15: #{tpu_custom_call.1} parent=1 // pred_check_branch
      %41 = sbr.rel (0) target = $region17
    $region16: #{tpu_custom_call.1} parent=1 // pred_region
      _
    $region17: #{tpu_custom_call.1} parent=1 // pred_fallthru
      _
    // Predicated region
    $region18: #{tpu_custom_call.1} parent=1 // pred_check
      _
    $region19: #{tpu_custom_call.1} parent=1 // pred_check_branch
      %43 = sbr.rel (0) target = $region21
    $region20: #{tpu_custom_call.1} parent=1 // pred_region
      %s45 = ssub.s32 2048, 2048
      %46 = vsyncadd [#allocation7], %s45
      %s47 = sshll.u32 [#allocation8], 4
      %s48 = int_to_ptr.vmem [resolvable:$true] %s47
      %53 = dma.hbm_to_vmem [thread:$0]  %s4, 2048, %s48, [#allocation7], 128, 128, 8
    $region21: #{tpu_custom_call.1} parent=1 // pred_fallthru
      _
    // Predicated region
    $region22: #{tpu_custom_call.1} parent=1 // pred_check
      _
    $region23: #{tpu_custom_call.1} parent=1 // pred_check_branch
      %55 = sbr.rel (0) target = $region25
    $region24: #{tpu_custom_call.1} parent=1 // pred_region
      %s57 = ssub.s32 2048, 2048
      %58 = vsyncadd [#allocation10], %s57
      %s59 = sshll.u32 [#allocation9], 4
      %s60 = int_to_ptr.vmem [resolvable:$true] %s59
      %65 = dma.hbm_to_vmem [thread:$0]  %s5, 2048, %s60, [#allocation10], 128, 128, 8
    $region25: #{tpu_custom_call.1} parent=1 // pred_fallthru
      _
    // Predicated region
    $region26: #{tpu_custom_call.1} parent=1 // pred_check
      _
    $region27: #{tpu_custom_call.1} parent=1 // pred_check_branch
      %67 = sbr.rel (0) target = $region29
    $region28: #{tpu_custom_call.1} parent=1 // pred_region
      _
    $region29: #{tpu_custom_call.1} parent=1 // pred_fallthru
      _
    // Predicated region
    $region30: #{tpu_custom_call.1} parent=1 // pred_check
      _
    $region31: #{tpu_custom_call.1} parent=1 // pred_check_branch
      %69 = sbr.rel (0) target = $region33
    $region32: #{tpu_custom_call.1} parent=1 // pred_region
      %70 = dma.done [#allocation4], 128
    $region33: #{tpu_custom_call.1} parent=1 // pred_fallthru
      _
    // Predicated region
    $region34: #{tpu_custom_call.1} parent=1 // pred_check
      _
    $region35: #{tpu_custom_call.1} parent=1 // pred_check_branch
      %72 = sbr.rel (0) target = $region37
    $region36: #{tpu_custom_call.1} parent=1 // pred_region
      %73 = dma.done [#allocation7], 2048
    $region37: #{tpu_custom_call.1} parent=1 // pred_fallthru
      _
    // Predicated region
    $region38: #{tpu_custom_call.1} parent=1 // pred_check
      _
    $region39: #{tpu_custom_call.1} parent=1 // pred_check_branch
      %75 = sbr.rel (0) target = $region41
    $region40: #{tpu_custom_call.1} parent=1 // pred_region
      %76 = dma.done [#allocation7], 2048
    $region41: #{tpu_custom_call.1} parent=1 // pred_fallthru
      _
    // Predicated region
    $region42: #{tpu_custom_call.1} parent=1 // pred_check
      _
    $region43: #{tpu_custom_call.1} parent=1 // pred_check_branch
      %78 = sbr.rel (0) target = $region45
    $region44: #{tpu_custom_call.1} parent=1 // pred_region
      %79 = dma.done [#allocation10], 2048
    $region45: #{tpu_custom_call.1} parent=1 // pred_fallthru
      _
    %v80 = vld [vmem:[%s2] sm:$0x1]
    %v81 = vld [vmem:[%s3] sm:$0x1]
    %v82 = vadd.f32 %v80, %v81
    %v83 = vld [vmem:[#allocation3] sm:$0xff]
    %v84 = vld [vmem:[#allocation6] sm:$0xff]
    %v85 = vld [vmem:[#allocation6 + $0x8] sm:$0xff]
    %v86 = vld [vmem:[#allocation6 + $0x10] sm:$0xff]
    %v87 = vld [vmem:[#allocation6 + $0x18] sm:$0xff]
    %v88 = vld [vmem:[#allocation6 + $0x20] sm:$0xff]
    %v89 = vld [vmem:[#allocation6 + $0x28] sm:$0xff]
    %v90 = vld [vmem:[#allocation6 + $0x30] sm:$0xff]
    %v91 = vld [vmem:[#allocation6 + $0x38] sm:$0xff]
    %v92 = vld [vmem:[#allocation6 + $0x40] sm:$0xff]
    %v93 = vld [vmem:[#allocation6 + $0x48] sm:$0xff]
    %v94 = vld [vmem:[#allocation6 + $0x50] sm:$0xff]
    %v95 = vld [vmem:[#allocation6 + $0x58] sm:$0xff]
    %v96 = vld [vmem:[#allocation6 + $0x60] sm:$0xff]
    %v97 = vld [vmem:[#allocation6 + $0x68] sm:$0xff]
    %v98 = vld [vmem:[#allocation6 + $0x70] sm:$0xff]
    %v99 = vld [vmem:[#allocation6 + $0x78] sm:$0xff]
    %v101 = vlaneseq
    %v102 = vshrl.u32 %v101, 7
    %v103 = vsub.s32 0, %v102
    %v104 = vrot.slane %v82, %v103
    %106 = vmatprep.subr.mxu0 0.0
    %107 = vmatpush1.msra.mxu0 %v99
    %108 = vmatprep.subr.mxu0 0.0
    %109 = vmatpush1.msra.mxu0 %v98
    %110 = vmatprep.subr.mxu0 0.0
    %111 = vmatpush1.msra.mxu0 %v97
    %112 = vmatprep.subr.mxu0 0.0
    %113 = vmatpush1.msra.mxu0 %v96
    %114 = vmatprep.subr.mxu0 0.0
    %115 = vmatpush1.msra.mxu0 %v95
    %116 = vmatprep.subr.mxu0 0.0
    %117 = vmatpush1.msra.mxu0 %v94
    %118 = vmatprep.subr.mxu0 0.0
    %119 = vmatpush1.msra.mxu0 %v93
    %120 = vmatprep.subr.mxu0 0.0
    %121 = vmatpush1.msra.mxu0 %v92
    %122 = vmatprep.subr.mxu0 0.0
    %123 = vmatpush1.msra.mxu0 %v91
    %124 = vmatprep.subr.mxu0 0.0
    %125 = vmatpush1.msra.mxu0 %v90
    %126 = vmatprep.subr.mxu0 0.0
    %127 = vmatpush1.msra.mxu0 %v89
    %128 = vmatprep.subr.mxu0 0.0
    %129 = vmatpush1.msra.mxu0 %v88
    %130 = vmatprep.subr.mxu0 0.0
    %131 = vmatpush1.msra.mxu0 %v87
    %132 = vmatprep.subr.mxu0 0.0
    %133 = vmatpush1.msra.mxu0 %v86
    %134 = vmatprep.subr.mxu0 0.0
    %135 = vmatpush1.msra.mxu0 %v85
    %136 = vmatprep.subr.mxu0 0.0
    %137 = vmatpush1.msra.mxu0 %v84
    %138 = vmatprep.subr.mxu0 0.0
    %139 = vmatpush2.msra.mxu0 0.0
    %140 = vmatprep.subr.mxu0 0.0
    %141 = vmatpush2.msra.mxu0 0.0
    %142 = vmatprep.subr.mxu0 0.0
    %143 = vmatpush2.msra.mxu0 0.0
    %144 = vmatprep.subr.mxu0 0.0
    %145 = vmatpush2.msra.mxu0 0.0
    %146 = vmatprep.subr.mxu0 0.0
    %147 = vmatpush2.msra.mxu0 0.0
    %148 = vmatprep.subr.mxu0 0.0
    %149 = vmatpush2.msra.mxu0 0.0
    %150 = vmatprep.subr.mxu0 0.0
    %151 = vmatpush2.msra.mxu0 0.0
    %152 = vmatprep.subr.mxu0 0.0
    %153 = vmatpush2.msra.mxu0 0.0
    %154 = vmatprep.subr.mxu0 0.0
    %155 = vmatpush2.msra.mxu0 0.0
    %156 = vmatprep.subr.mxu0 0.0
    %157 = vmatpush2.msra.mxu0 0.0
    %158 = vmatprep.subr.mxu0 0.0
    %159 = vmatpush2.msra.mxu0 0.0
    %160 = vmatprep.subr.mxu0 0.0
    %161 = vmatpush2.msra.mxu0 0.0
    %162 = vmatprep.subr.mxu0 0.0
    %163 = vmatpush2.msra.mxu0 0.0
    %164 = vmatprep.subr.mxu0 0.0
    %165 = vmatpush2.msra.mxu0 0.0
    %166 = vmatprep.subr.mxu0 0.0
    %167 = vmatpush2.msra.mxu0 0.0
    %168 = vmatprep.subr.mxu0 0.0
    %169 = vmatpush2.msra.mxu0 0.0
    %170 = vmatprep.mubr.f32.mxu0 0.0
    %171 = vmatmul.mubr.f32.gmra.mxu0 %v83
    %v172 = vpop.f32.mrf.mxu0
    %v173 = vadd.f32 %v104, %v172
    %v174 = vpop.f32.mrf.mxu0
    %175 = vdwg.mxu0
    %176 = vst [vmem:[#allocation2] sm:$0xff] %v173
    %v177 = vld [vmem:[#allocation8] sm:$0xff]
    %v178 = vld [vmem:[#allocation8 + $0x8] sm:$0xff]
    %v179 = vld [vmem:[#allocation8 + $0x10] sm:$0xff]
    %v180 = vld [vmem:[#allocation8 + $0x18] sm:$0xff]
    %v181 = vld [vmem:[#allocation8 + $0x20] sm:$0xff]
    %v182 = vld [vmem:[#allocation8 + $0x28] sm:$0xff]
    %v183 = vld [vmem:[#allocation8 + $0x30] sm:$0xff]
    %v184 = vld [vmem:[#allocation8 + $0x38] sm:$0xff]
    %v185 = vld [vmem:[#allocation8 + $0x40] sm:$0xff]
    %v186 = vld [vmem:[#allocation8 + $0x48] sm:$0xff]
    %v187 = vld [vmem:[#allocation8 + $0x50] sm:$0xff]
    %v188 = vld [vmem:[#allocation8 + $0x58] sm:$0xff]
    %v189 = vld [vmem:[#allocation8 + $0x60] sm:$0xff]
    %v190 = vld [vmem:[#allocation8 + $0x68] sm:$0xff]
    %v191 = vld [vmem:[#allocation8 + $0x70] sm:$0xff]
    %v192 = vld [vmem:[#allocation8 + $0x78] sm:$0xff]
    %v193 = vld [vmem:[#allocation2] sm:$0x1]
    %194 = vmatprep.subr.mxu0 0.0
    %195 = vmatpush1.msra.mxu0 %v192
    %196 = vmatprep.subr.mxu0 0.0
    %197 = vmatpush1.msra.mxu0 %v191
    %198 = vmatprep.subr.mxu0 0.0
    %199 = vmatpush1.msra.mxu0 %v190
    %200 = vmatprep.subr.mxu0 0.0
    %201 = vmatpush1.msra.mxu0 %v189
    %202 = vmatprep.subr.mxu0 0.0
    %203 = vmatpush1.msra.mxu0 %v188
    %204 = vmatprep.subr.mxu0 0.0
    %205 = vmatpush1.msra.mxu0 %v187
    %206 = vmatprep.subr.mxu0 0.0
    %207 = vmatpush1.msra.mxu0 %v186
    %208 = vmatprep.subr.mxu0 0.0
    %209 = vmatpush1.msra.mxu0 %v185
    %210 = vmatprep.subr.mxu0 0.0
    %211 = vmatpush1.msra.mxu0 %v184
    %212 = vmatprep.subr.mxu0 0.0
    %213 = vmatpush1.msra.mxu0 %v183
    %214 = vmatprep.subr.mxu0 0.0
    %215 = vmatpush1.msra.mxu0 %v182
    %216 = vmatprep.subr.mxu0 0.0
    %217 = vmatpush1.msra.mxu0 %v181
    %218 = vmatprep.subr.mxu0 0.0
    %219 = vmatpush1.msra.mxu0 %v180
    %220 = vmatprep.subr.mxu0 0.0
    %221 = vmatpush1.msra.mxu0 %v179
    %222 = vmatprep.subr.mxu0 0.0
    %223 = vmatpush1.msra.mxu0 %v178
    %224 = vmatprep.subr.mxu0 0.0
    %225 = vmatpush1.msra.mxu0 %v177
    %226 = vmatprep.subr.mxu0 0.0
    %227 = vmatpush2.msra.mxu0 0.0
    %228 = vmatprep.subr.mxu0 0.0
    %229 = vmatpush2.msra.mxu0 0.0
    %230 = vmatprep.subr.mxu0 0.0
    %231 = vmatpush2.msra.mxu0 0.0
    %232 = vmatprep.subr.mxu0 0.0
    %233 = vmatpush2.msra.mxu0 0.0
    %234 = vmatprep.subr.mxu0 0.0
    %235 = vmatpush2.msra.mxu0 0.0
    %236 = vmatprep.subr.mxu0 0.0
    %237 = vmatpush2.msra.mxu0 0.0
    %238 = vmatprep.subr.mxu0 0.0
    %239 = vmatpush2.msra.mxu0 0.0
    %240 = vmatprep.subr.mxu0 0.0
    %241 = vmatpush2.msra.mxu0 0.0
    %242 = vmatprep.subr.mxu0 0.0
    %243 = vmatpush2.msra.mxu0 0.0
    %244 = vmatprep.subr.mxu0 0.0
    %245 = vmatpush2.msra.mxu0 0.0
    %246 = vmatprep.subr.mxu0 0.0
    %247 = vmatpush2.msra.mxu0 0.0
    %248 = vmatprep.subr.mxu0 0.0
    %249 = vmatpush2.msra.mxu0 0.0
    %250 = vmatprep.subr.mxu0 0.0
    %251 = vmatpush2.msra.mxu0 0.0
    %252 = vmatprep.subr.mxu0 0.0
    %253 = vmatpush2.msra.mxu0 0.0
    %254 = vmatprep.subr.mxu0 0.0
    %255 = vmatpush2.msra.mxu0 0.0
    %256 = vmatprep.subr.mxu0 0.0
    %257 = vmatpush2.msra.mxu0 0.0
    %258 = vmatprep.mubr.f32.mxu0 0.0
    %259 = vmatmul.mubr.f32.gmra.mxu0 0.0
    %v260 = vpop.f32.mrf.mxu0
    %v261 = vadd.f32 0.0, %v260
    %v262 = vpop.f32.mrf.mxu0
    %263 = vdwg.mxu0
    %v264 = vadd.f32 %v193, %v261
    %v265 = vtanh.pop %v264
    %266 = vst [vmem:[#allocation2] sm:$0x1] %v265
    %v267 = vld [vmem:[#allocation2 + $0x1] sm:$0x1]
    %268 = vmatprep.subr.mxu0 0.0
    %269 = vmatpush1.msra.mxu0 %v192
    %270 = vmatprep.subr.mxu0 0.0
    %271 = vmatpush1.msra.mxu0 %v191
    %272 = vmatprep.subr.mxu0 0.0
    %273 = vmatpush1.msra.mxu0 %v190
    %274 = vmatprep.subr.mxu0 0.0
    %275 = vmatpush1.msra.mxu0 %v189
    %276 = vmatprep.subr.mxu0 0.0
    %277 = vmatpush1.msra.mxu0 %v188
    %278 = vmatprep.subr.mxu0 0.0
    %279 = vmatpush1.msra.mxu0 %v187
    %280 = vmatprep.subr.mxu0 0.0
    %281 = vmatpush1.msra.mxu0 %v186
    %282 = vmatprep.subr.mxu0 0.0
    %283 = vmatpush1.msra.mxu0 %v185
    %284 = vmatprep.subr.mxu0 0.0
    %285 = vmatpush1.msra.mxu0 %v184
    %286 = vmatprep.subr.mxu0 0.0
    %287 = vmatpush1.msra.mxu0 %v183
    %288 = vmatprep.subr.mxu0 0.0
    %289 = vmatpush1.msra.mxu0 %v182
    %290 = vmatprep.subr.mxu0 0.0
    %291 = vmatpush1.msra.mxu0 %v181
    %292 = vmatprep.subr.mxu0 0.0
    %293 = vmatpush1.msra.mxu0 %v180
    %294 = vmatprep.subr.mxu0 0.0
    %295 = vmatpush1.msra.mxu0 %v179
    %296 = vmatprep.subr.mxu0 0.0
    %297 = vmatpush1.msra.mxu0 %v178
    %298 = vmatprep.subr.mxu0 0.0
    %299 = vmatpush1.msra.mxu0 %v177
    %300 = vmatprep.subr.mxu0 0.0
    %301 = vmatpush2.msra.mxu0 0.0
    %302 = vmatprep.subr.mxu0 0.0
    %303 = vmatpush2.msra.mxu0 0.0
    %304 = vmatprep.subr.mxu0 0.0
    %305 = vmatpush2.msra.mxu0 0.0
    %306 = vmatprep.subr.mxu0 0.0
    %307 = vmatpush2.msra.mxu0 0.0
    %308 = vmatprep.subr.mxu0 0.0
    %309 = vmatpush2.msra.mxu0 0.0
    %310 = vmatprep.subr.mxu0 0.0
    %311 = vmatpush2.msra.mxu0 0.0
    %312 = vmatprep.subr.mxu0 0.0
    %313 = vmatpush2.msra.mxu0 0.0
    %314 = vmatprep.subr.mxu0 0.0
    %315 = vmatpush2.msra.mxu0 0.0
    %316 = vmatprep.subr.mxu0 0.0
    %317 = vmatpush2.msra.mxu0 0.0
    %318 = vmatprep.subr.mxu0 0.0
    %319 = vmatpush2.msra.mxu0 0.0
    %320 = vmatprep.subr.mxu0 0.0
    %321 = vmatpush2.msra.mxu0 0.0
    %322 = vmatprep.subr.mxu0 0.0
    %323 = vmatpush2.msra.mxu0 0.0
    %324 = vmatprep.subr.mxu0 0.0
    %325 = vmatpush2.msra.mxu0 0.0
    %326 = vmatprep.subr.mxu0 0.0
    %327 = vmatpush2.msra.mxu0 0.0
    %328 = vmatprep.subr.mxu0 0.0
    %329 = vmatpush2.msra.mxu0 0.0
    %330 = vmatprep.subr.mxu0 0.0
    %331 = vmatpush2.msra.mxu0 0.0
    %332 = vmatprep.mubr.f32.mxu0 0.0
    %333 = vmatmul.mubr.f32.gmra.mxu0 %v265
    %v334 = vpop.f32.mrf.mxu0
    %v335 = vadd.f32 0.0, %v334
    %v336 = vpop.f32.mrf.mxu0
    %337 = vdwg.mxu0
    %v338 = vadd.f32 %v267, %v335
    %v339 = vtanh.pop %v338
    %340 = vst [vmem:[#allocation2 + $0x1] sm:$0x1] %v339
    %v341 = vld [vmem:[#allocation2 + $0x2] sm:$0x1]
    %342 = vmatprep.subr.mxu0 0.0
    %343 = vmatpush1.msra.mxu0 %v192
    %344 = vmatprep.subr.mxu0 0.0
    %345 = vmatpush1.msra.mxu0 %v191
    %346 = vmatprep.subr.mxu0 0.0
    %347 = vmatpush1.msra.mxu0 %v190
    %348 = vmatprep.subr.mxu0 0.0
    %349 = vmatpush1.msra.mxu0 %v189
    %350 = vmatprep.subr.mxu0 0.0
    %351 = vmatpush1.msra.mxu0 %v188
    %352 = vmatprep.subr.mxu0 0.0
    %353 = vmatpush1.msra.mxu0 %v187
    %354 = vmatprep.subr.mxu0 0.0
    %355 = vmatpush1.msra.mxu0 %v186
    %356 = vmatprep.subr.mxu0 0.0
    %357 = vmatpush1.msra.mxu0 %v185
    %358 = vmatprep.subr.mxu0 0.0
    %359 = vmatpush1.msra.mxu0 %v184
    %360 = vmatprep.subr.mxu0 0.0
    %361 = vmatpush1.msra.mxu0 %v183
    %362 = vmatprep.subr.mxu0 0.0
    %363 = vmatpush1.msra.mxu0 %v182
    %364 = vmatprep.subr.mxu0 0.0
    %365 = vmatpush1.msra.mxu0 %v181
    %366 = vmatprep.subr.mxu0 0.0
    %367 = vmatpush1.msra.mxu0 %v180
    %368 = vmatprep.subr.mxu0 0.0
    %369 = vmatpush1.msra.mxu0 %v179
    %370 = vmatprep.subr.mxu0 0.0
    %371 = vmatpush1.msra.mxu0 %v178
    %372 = vmatprep.subr.mxu0 0.0
    %373 = vmatpush1.msra.mxu0 %v177
    %374 = vmatprep.subr.mxu0 0.0
    %375 = vmatpush2.msra.mxu0 0.0
    %376 = vmatprep.subr.mxu0 0.0
    %377 = vmatpush2.msra.mxu0 0.0
    %378 = vmatprep.subr.mxu0 0.0
    %379 = vmatpush2.msra.mxu0 0.0
    %380 = vmatprep.subr.mxu0 0.0
    %381 = vmatpush2.msra.mxu0 0.0
    %382 = vmatprep.subr.mxu0 0.0
    %383 = vmatpush2.msra.mxu0 0.0
    %384 = vmatprep.subr.mxu0 0.0
    %385 = vmatpush2.msra.mxu0 0.0
    %386 = vmatprep.subr.mxu0 0.0
    %387 = vmatpush2.msra.mxu0 0.0
    %388 = vmatprep.subr.mxu0 0.0
    %389 = vmatpush2.msra.mxu0 0.0
    %390 = vmatprep.subr.mxu0 0.0
    %391 = vmatpush2.msra.mxu0 0.0
    %392 = vmatprep.subr.mxu0 0.0
    %393 = vmatpush2.msra.mxu0 0.0
    %394 = vmatprep.subr.mxu0 0.0
    %395 = vmatpush2.msra.mxu0 0.0
    %396 = vmatprep.subr.mxu0 0.0
    %397 = vmatpush2.msra.mxu0 0.0
    %398 = vmatprep.subr.mxu0 0.0
    %399 = vmatpush2.msra.mxu0 0.0
    %400 = vmatprep.subr.mxu0 0.0
    %401 = vmatpush2.msra.mxu0 0.0
    %402 = vmatprep.subr.mxu0 0.0
    %403 = vmatpush2.msra.mxu0 0.0
    %404 = vmatprep.subr.mxu0 0.0
    %405 = vmatpush2.msra.mxu0 0.0
    %406 = vmatprep.mubr.f32.mxu0 0.0
    %407 = vmatmul.mubr.f32.gmra.mxu0 %v339
    %v408 = vpop.f32.mrf.mxu0
    %v409 = vadd.f32 0.0, %v408
    %v410 = vpop.f32.mrf.mxu0
    %411 = vdwg.mxu0
    %v412 = vadd.f32 %v341, %v409
    %v413 = vtanh.pop %v412
    %414 = vst [vmem:[#allocation2 + $0x2] sm:$0x1] %v413
    %v415 = vld [vmem:[#allocation2 + $0x3] sm:$0x1]
    %416 = vmatprep.subr.mxu0 0.0
    %417 = vmatpush1.msra.mxu0 %v192
    %418 = vmatprep.subr.mxu0 0.0
    %419 = vmatpush1.msra.mxu0 %v191
    %420 = vmatprep.subr.mxu0 0.0
    %421 = vmatpush1.msra.mxu0 %v190
    %422 = vmatprep.subr.mxu0 0.0
    %423 = vmatpush1.msra.mxu0 %v189
    %424 = vmatprep.subr.mxu0 0.0
    %425 = vmatpush1.msra.mxu0 %v188
    %426 = vmatprep.subr.mxu0 0.0
    %427 = vmatpush1.msra.mxu0 %v187
    %428 = vmatprep.subr.mxu0 0.0
    %429 = vmatpush1.msra.mxu0 %v186
    %430 = vmatprep.subr.mxu0 0.0
    %431 = vmatpush1.msra.mxu0 %v185
    %432 = vmatprep.subr.mxu0 0.0
    %433 = vmatpush1.msra.mxu0 %v184
    %434 = vmatprep.subr.mxu0 0.0
    %435 = vmatpush1.msra.mxu0 %v183
    %436 = vmatprep.subr.mxu0 0.0
    %437 = vmatpush1.msra.mxu0 %v182
    %438 = vmatprep.subr.mxu0 0.0
    %439 = vmatpush1.msra.mxu0 %v181
    %440 = vmatprep.subr.mxu0 0.0
    %441 = vmatpush1.msra.mxu0 %v180
    %442 = vmatprep.subr.mxu0 0.0
    %443 = vmatpush1.msra.mxu0 %v179
    %444 = vmatprep.subr.mxu0 0.0
    %445 = vmatpush1.msra.mxu0 %v178
    %446 = vmatprep.subr.mxu0 0.0
    %447 = vmatpush1.msra.mxu0 %v177
    %448 = vmatprep.subr.mxu0 0.0
    %449 = vmatpush2.msra.mxu0 0.0
    %450 = vmatprep.subr.mxu0 0.0
    %451 = vmatpush2.msra.mxu0 0.0
    %452 = vmatprep.subr.mxu0 0.0
    %453 = vmatpush2.msra.mxu0 0.0
    %454 = vmatprep.subr.mxu0 0.0
    %455 = vmatpush2.msra.mxu0 0.0
    %456 = vmatprep.subr.mxu0 0.0
    %457 = vmatpush2.msra.mxu0 0.0
    %458 = vmatprep.subr.mxu0 0.0
    %459 = vmatpush2.msra.mxu0 0.0
    %460 = vmatprep.subr.mxu0 0.0
    %461 = vmatpush2.msra.mxu0 0.0
    %462 = vmatprep.subr.mxu0 0.0
    %463 = vmatpush2.msra.mxu0 0.0
    %464 = vmatprep.subr.mxu0 0.0
    %465 = vmatpush2.msra.mxu0 0.0
    %466 = vmatprep.subr.mxu0 0.0
    %467 = vmatpush2.msra.mxu0 0.0
    %468 = vmatprep.subr.mxu0 0.0
    %469 = vmatpush2.msra.mxu0 0.0
    %470 = vmatprep.subr.mxu0 0.0
    %471 = vmatpush2.msra.mxu0 0.0
    %472 = vmatprep.subr.mxu0 0.0
    %473 = vmatpush2.msra.mxu0 0.0
    %474 = vmatprep.subr.mxu0 0.0
    %475 = vmatpush2.msra.mxu0 0.0
    %476 = vmatprep.subr.mxu0 0.0
    %477 = vmatpush2.msra.mxu0 0.0
    %478 = vmatprep.subr.mxu0 0.0
    %479 = vmatpush2.msra.mxu0 0.0
    %480 = vmatprep.mubr.f32.mxu0 0.0
    %481 = vmatmul.mubr.f32.gmra.mxu0 %v413
    %v482 = vpop.f32.mrf.mxu0
    %v483 = vadd.f32 0.0, %v482
    %v484 = vpop.f32.mrf.mxu0
    %485 = vdwg.mxu0
    %v486 = vadd.f32 %v415, %v483
    %v487 = vtanh.pop %v486
    %488 = vst [vmem:[#allocation2 + $0x3] sm:$0x1] %v487
    %v489 = vld [vmem:[#allocation2 + $0x4] sm:$0x1]
    %490 = vmatprep.subr.mxu0 0.0
    %491 = vmatpush1.msra.mxu0 %v192
    %492 = vmatprep.subr.mxu0 0.0
    %493 = vmatpush1.msra.mxu0 %v191
    %494 = vmatprep.subr.mxu0 0.0
    %495 = vmatpush1.msra.mxu0 %v190
    %496 = vmatprep.subr.mxu0 0.0
    %497 = vmatpush1.msra.mxu0 %v189
    %498 = vmatprep.subr.mxu0 0.0
    %499 = vmatpush1.msra.mxu0 %v188
    %500 = vmatprep.subr.mxu0 0.0
    %501 = vmatpush1.msra.mxu0 %v187
    %502 = vmatprep.subr.mxu0 0.0
    %503 = vmatpush1.msra.mxu0 %v186
    %504 = vmatprep.subr.mxu0 0.0
    %505 = vmatpush1.msra.mxu0 %v185
    %506 = vmatprep.subr.mxu0 0.0
    %507 = vmatpush1.msra.mxu0 %v184
    %508 = vmatprep.subr.mxu0 0.0
    %509 = vmatpush1.msra.mxu0 %v183
    %510 = vmatprep.subr.mxu0 0.0
    %511 = vmatpush1.msra.mxu0 %v182
    %512 = vmatprep.subr.mxu0 0.0
    %513 = vmatpush1.msra.mxu0 %v181
    %514 = vmatprep.subr.mxu0 0.0
    %515 = vmatpush1.msra.mxu0 %v180
    %516 = vmatprep.subr.mxu0 0.0
    %517 = vmatpush1.msra.mxu0 %v179
    %518 = vmatprep.subr.mxu0 0.0
    %519 = vmatpush1.msra.mxu0 %v178
    %520 = vmatprep.subr.mxu0 0.0
    %521 = vmatpush1.msra.mxu0 %v177
    %522 = vmatprep.subr.mxu0 0.0
    %523 = vmatpush2.msra.mxu0 0.0
    %524 = vmatprep.subr.mxu0 0.0
    %525 = vmatpush2.msra.mxu0 0.0
    %526 = vmatprep.subr.mxu0 0.0
    %527 = vmatpush2.msra.mxu0 0.0
    %528 = vmatprep.subr.mxu0 0.0
    %529 = vmatpush2.msra.mxu0 0.0
    %530 = vmatprep.subr.mxu0 0.0
    %531 = vmatpush2.msra.mxu0 0.0
    %532 = vmatprep.subr.mxu0 0.0
    %533 = vmatpush2.msra.mxu0 0.0
    %534 = vmatprep.subr.mxu0 0.0
    %535 = vmatpush2.msra.mxu0 0.0
    %536 = vmatprep.subr.mxu0 0.0
    %537 = vmatpush2.msra.mxu0 0.0
    %538 = vmatprep.subr.mxu0 0.0
    %539 = vmatpush2.msra.mxu0 0.0
    %540 = vmatprep.subr.mxu0 0.0
    %541 = vmatpush2.msra.mxu0 0.0
    %542 = vmatprep.subr.mxu0 0.0
    %543 = vmatpush2.msra.mxu0 0.0
    %544 = vmatprep.subr.mxu0 0.0
    %545 = vmatpush2.msra.mxu0 0.0
    %546 = vmatprep.subr.mxu0 0.0
    %547 = vmatpush2.msra.mxu0 0.0
    %548 = vmatprep.subr.mxu0 0.0
    %549 = vmatpush2.msra.mxu0 0.0
    %550 = vmatprep.subr.mxu0 0.0
    %551 = vmatpush2.msra.mxu0 0.0
    %552 = vmatprep.subr.mxu0 0.0
    %553 = vmatpush2.msra.mxu0 0.0
    %554 = vmatprep.mubr.f32.mxu0 0.0
    %555 = vmatmul.mubr.f32.gmra.mxu0 %v487
    %v556 = vpop.f32.mrf.mxu0
    %v557 = vadd.f32 0.0, %v556
    %v558 = vpop.f32.mrf.mxu0
    %559 = vdwg.mxu0
    %v560 = vadd.f32 %v489, %v557
    %v561 = vtanh.pop %v560
    %562 = vst [vmem:[#allocation2 + $0x4] sm:$0x1] %v561
    %v563 = vld [vmem:[#allocation2 + $0x5] sm:$0x1]
    %564 = vmatprep.subr.mxu0 0.0
    %565 = vmatpush1.msra.mxu0 %v192
    %566 = vmatprep.subr.mxu0 0.0
    %567 = vmatpush1.msra.mxu0 %v191
    %568 = vmatprep.subr.mxu0 0.0
    %569 = vmatpush1.msra.mxu0 %v190
    %570 = vmatprep.subr.mxu0 0.0
    %571 = vmatpush1.msra.mxu0 %v189
    %572 = vmatprep.subr.mxu0 0.0
    %573 = vmatpush1.msra.mxu0 %v188
    %574 = vmatprep.subr.mxu0 0.0
    %575 = vmatpush1.msra.mxu0 %v187
    %576 = vmatprep.subr.mxu0 0.0
    %577 = vmatpush1.msra.mxu0 %v186
    %578 = vmatprep.subr.mxu0 0.0
    %579 = vmatpush1.msra.mxu0 %v185
    %580 = vmatprep.subr.mxu0 0.0
    %581 = vmatpush1.msra.mxu0 %v184
    %582 = vmatprep.subr.mxu0 0.0
    %583 = vmatpush1.msra.mxu0 %v183
    %584 = vmatprep.subr.mxu0 0.0
    %585 = vmatpush1.msra.mxu0 %v182
    %586 = vmatprep.subr.mxu0 0.0
    %587 = vmatpush1.msra.mxu0 %v181
    %588 = vmatprep.subr.mxu0 0.0
    %589 = vmatpush1.msra.mxu0 %v180
    %590 = vmatprep.subr.mxu0 0.0
    %591 = vmatpush1.msra.mxu0 %v179
    %592 = vmatprep.subr.mxu0 0.0
    %593 = vmatpush1.msra.mxu0 %v178
    %594 = vmatprep.subr.mxu0 0.0
    %595 = vmatpush1.msra.mxu0 %v177
    %596 = vmatprep.subr.mxu0 0.0
    %597 = vmatpush2.msra.mxu0 0.0
    %598 = vmatprep.subr.mxu0 0.0
    %599 = vmatpush2.msra.mxu0 0.0
    %600 = vmatprep.subr.mxu0 0.0
    %601 = vmatpush2.msra.mxu0 0.0
    %602 = vmatprep.subr.mxu0 0.0
    %603 = vmatpush2.msra.mxu0 0.0
    %604 = vmatprep.subr.mxu0 0.0
    %605 = vmatpush2.msra.mxu0 0.0
    %606 = vmatprep.subr.mxu0 0.0
    %607 = vmatpush2.msra.mxu0 0.0
    %608 = vmatprep.subr.mxu0 0.0
    %609 = vmatpush2.msra.mxu0 0.0
    %610 = vmatprep.subr.mxu0 0.0
    %611 = vmatpush2.msra.mxu0 0.0
    %612 = vmatprep.subr.mxu0 0.0
    %613 = vmatpush2.msra.mxu0 0.0
    %614 = vmatprep.subr.mxu0 0.0
    %615 = vmatpush2.msra.mxu0 0.0
    %616 = vmatprep.subr.mxu0 0.0
    %617 = vmatpush2.msra.mxu0 0.0
    %618 = vmatprep.subr.mxu0 0.0
    %619 = vmatpush2.msra.mxu0 0.0
    %620 = vmatprep.subr.mxu0 0.0
    %621 = vmatpush2.msra.mxu0 0.0
    %622 = vmatprep.subr.mxu0 0.0
    %623 = vmatpush2.msra.mxu0 0.0
    %624 = vmatprep.subr.mxu0 0.0
    %625 = vmatpush2.msra.mxu0 0.0
    %626 = vmatprep.subr.mxu0 0.0
    %627 = vmatpush2.msra.mxu0 0.0
    %628 = vmatprep.mubr.f32.mxu0 0.0
    %629 = vmatmul.mubr.f32.gmra.mxu0 %v561
    %v630 = vpop.f32.mrf.mxu0
    %v631 = vadd.f32 0.0, %v630
    %v632 = vpop.f32.mrf.mxu0
    %633 = vdwg.mxu0
    %v634 = vadd.f32 %v563, %v631
    %v635 = vtanh.pop %v634
    %636 = vst [vmem:[#allocation2 + $0x5] sm:$0x1] %v635
    %v637 = vld [vmem:[#allocation2 + $0x6] sm:$0x1]
    %638 = vmatprep.subr.mxu0 0.0
    %639 = vmatpush1.msra.mxu0 %v192
    %640 = vmatprep.subr.mxu0 0.0
    %641 = vmatpush1.msra.mxu0 %v191
    %642 = vmatprep.subr.mxu0 0.0
    %643 = vmatpush1.msra.mxu0 %v190
    %644 = vmatprep.subr.mxu0 0.0
    %645 = vmatpush1.msra.mxu0 %v189
    %646 = vmatprep.subr.mxu0 0.0
    %647 = vmatpush1.msra.mxu0 %v188
    %648 = vmatprep.subr.mxu0 0.0
    %649 = vmatpush1.msra.mxu0 %v187
    %650 = vmatprep.subr.mxu0 0.0
    %651 = vmatpush1.msra.mxu0 %v186
    %652 = vmatprep.subr.mxu0 0.0
    %653 = vmatpush1.msra.mxu0 %v185
    %654 = vmatprep.subr.mxu0 0.0
    %655 = vmatpush1.msra.mxu0 %v184
    %656 = vmatprep.subr.mxu0 0.0
    %657 = vmatpush1.msra.mxu0 %v183
    %658 = vmatprep.subr.mxu0 0.0
    %659 = vmatpush1.msra.mxu0 %v182
    %660 = vmatprep.subr.mxu0 0.0
    %661 = vmatpush1.msra.mxu0 %v181
    %662 = vmatprep.subr.mxu0 0.0
    %663 = vmatpush1.msra.mxu0 %v180
    %664 = vmatprep.subr.mxu0 0.0
    %665 = vmatpush1.msra.mxu0 %v179
    %666 = vmatprep.subr.mxu0 0.0
    %667 = vmatpush1.msra.mxu0 %v178
    %668 = vmatprep.subr.mxu0 0.0
    %669 = vmatpush1.msra.mxu0 %v177
    %670 = vmatprep.subr.mxu0 0.0
    %671 = vmatpush2.msra.mxu0 0.0
    %672 = vmatprep.subr.mxu0 0.0
    %673 = vmatpush2.msra.mxu0 0.0
    %674 = vmatprep.subr.mxu0 0.0
    %675 = vmatpush2.msra.mxu0 0.0
    %676 = vmatprep.subr.mxu0 0.0
    %677 = vmatpush2.msra.mxu0 0.0
    %678 = vmatprep.subr.mxu0 0.0
    %679 = vmatpush2.msra.mxu0 0.0
    %680 = vmatprep.subr.mxu0 0.0
    %681 = vmatpush2.msra.mxu0 0.0
    %682 = vmatprep.subr.mxu0 0.0
    %683 = vmatpush2.msra.mxu0 0.0
    %684 = vmatprep.subr.mxu0 0.0
    %685 = vmatpush2.msra.mxu0 0.0
    %686 = vmatprep.subr.mxu0 0.0
    %687 = vmatpush2.msra.mxu0 0.0
    %688 = vmatprep.subr.mxu0 0.0
    %689 = vmatpush2.msra.mxu0 0.0
    %690 = vmatprep.subr.mxu0 0.0
    %691 = vmatpush2.msra.mxu0 0.0
    %692 = vmatprep.subr.mxu0 0.0
    %693 = vmatpush2.msra.mxu0 0.0
    %694 = vmatprep.subr.mxu0 0.0
    %695 = vmatpush2.msra.mxu0 0.0
    %696 = vmatprep.subr.mxu0 0.0
    %697 = vmatpush2.msra.mxu0 0.0
    %698 = vmatprep.subr.mxu0 0.0
    %699 = vmatpush2.msra.mxu0 0.0
    %700 = vmatprep.subr.mxu0 0.0
    %701 = vmatpush2.msra.mxu0 0.0
    %702 = vmatprep.mubr.f32.mxu0 0.0
    %703 = vmatmul.mubr.f32.gmra.mxu0 %v635
    %v704 = vpop.f32.mrf.mxu0
    %v705 = vadd.f32 0.0, %v704
    %v706 = vpop.f32.mrf.mxu0
    %707 = vdwg.mxu0
    %v708 = vadd.f32 %v637, %v705
    %v709 = vtanh.pop %v708
    %710 = vst [vmem:[#allocation2 + $0x6] sm:$0x1] %v709
    %v711 = vld [vmem:[#allocation2 + $0x7] sm:$0x1]
    %712 = vmatprep.subr.mxu0 0.0
    %713 = vmatpush1.msra.mxu0 %v192
    %714 = vmatprep.subr.mxu0 0.0
    %715 = vmatpush1.msra.mxu0 %v191
    %716 = vmatprep.subr.mxu0 0.0
    %717 = vmatpush1.msra.mxu0 %v190
    %718 = vmatprep.subr.mxu0 0.0
    %719 = vmatpush1.msra.mxu0 %v189
    %720 = vmatprep.subr.mxu0 0.0
    %721 = vmatpush1.msra.mxu0 %v188
    %722 = vmatprep.subr.mxu0 0.0
    %723 = vmatpush1.msra.mxu0 %v187
    %724 = vmatprep.subr.mxu0 0.0
    %725 = vmatpush1.msra.mxu0 %v186
    %726 = vmatprep.subr.mxu0 0.0
    %727 = vmatpush1.msra.mxu0 %v185
    %728 = vmatprep.subr.mxu0 0.0
    %729 = vmatpush1.msra.mxu0 %v184
    %730 = vmatprep.subr.mxu0 0.0
    %731 = vmatpush1.msra.mxu0 %v183
    %732 = vmatprep.subr.mxu0 0.0
    %733 = vmatpush1.msra.mxu0 %v182
    %734 = vmatprep.subr.mxu0 0.0
    %735 = vmatpush1.msra.mxu0 %v181
    %736 = vmatprep.subr.mxu0 0.0
    %737 = vmatpush1.msra.mxu0 %v180
    %738 = vmatprep.subr.mxu0 0.0
    %739 = vmatpush1.msra.mxu0 %v179
    %740 = vmatprep.subr.mxu0 0.0
    %741 = vmatpush1.msra.mxu0 %v178
    %742 = vmatprep.subr.mxu0 0.0
    %743 = vmatpush1.msra.mxu0 %v177
    %744 = vmatprep.subr.mxu0 0.0
    %745 = vmatpush2.msra.mxu0 0.0
    %746 = vmatprep.subr.mxu0 0.0
    %747 = vmatpush2.msra.mxu0 0.0
    %748 = vmatprep.subr.mxu0 0.0
    %749 = vmatpush2.msra.mxu0 0.0
    %750 = vmatprep.subr.mxu0 0.0
    %751 = vmatpush2.msra.mxu0 0.0
    %752 = vmatprep.subr.mxu0 0.0
    %753 = vmatpush2.msra.mxu0 0.0
    %754 = vmatprep.subr.mxu0 0.0
    %755 = vmatpush2.msra.mxu0 0.0
    %756 = vmatprep.subr.mxu0 0.0
    %757 = vmatpush2.msra.mxu0 0.0
    %758 = vmatprep.subr.mxu0 0.0
    %759 = vmatpush2.msra.mxu0 0.0
    %760 = vmatprep.subr.mxu0 0.0
    %761 = vmatpush2.msra.mxu0 0.0
    %762 = vmatprep.subr.mxu0 0.0
    %763 = vmatpush2.msra.mxu0 0.0
    %764 = vmatprep.subr.mxu0 0.0
    %765 = vmatpush2.msra.mxu0 0.0
    %766 = vmatprep.subr.mxu0 0.0
    %767 = vmatpush2.msra.mxu0 0.0
    %768 = vmatprep.subr.mxu0 0.0
    %769 = vmatpush2.msra.mxu0 0.0
    %770 = vmatprep.subr.mxu0 0.0
    %771 = vmatpush2.msra.mxu0 0.0
    %772 = vmatprep.subr.mxu0 0.0
    %773 = vmatpush2.msra.mxu0 0.0
    %774 = vmatprep.subr.mxu0 0.0
    %775 = vmatpush2.msra.mxu0 0.0
    %776 = vmatprep.mubr.f32.mxu0 0.0
    %777 = vmatmul.mubr.f32.gmra.mxu0 %v709
    %v778 = vpop.f32.mrf.mxu0
    %v779 = vadd.f32 0.0, %v778
    %v780 = vpop.f32.mrf.mxu0
    %781 = vdwg.mxu0
    %v782 = vadd.f32 %v711, %v779
    %v783 = vtanh.pop %v782
    %784 = vst [vmem:[#allocation2 + $0x7] sm:$0x1] %v783
    %v785 = vld [vmem:[#allocation2] sm:$0xff]
    %v786 = vld [vmem:[#allocation9] sm:$0xff]
    %v787 = vld [vmem:[#allocation9 + $0x8] sm:$0xff]
    %v788 = vld [vmem:[#allocation9 + $0x10] sm:$0xff]
    %v789 = vld [vmem:[#allocation9 + $0x18] sm:$0xff]
    %v790 = vld [vmem:[#allocation9 + $0x20] sm:$0xff]
    %v791 = vld [vmem:[#allocation9 + $0x28] sm:$0xff]
    %v792 = vld [vmem:[#allocation9 + $0x30] sm:$0xff]
    %v793 = vld [vmem:[#allocation9 + $0x38] sm:$0xff]
    %v794 = vld [vmem:[#allocation9 + $0x40] sm:$0xff]
    %v795 = vld [vmem:[#allocation9 + $0x48] sm:$0xff]
    %v796 = vld [vmem:[#allocation9 + $0x50] sm:$0xff]
    %v797 = vld [vmem:[#allocation9 + $0x58] sm:$0xff]
    %v798 = vld [vmem:[#allocation9 + $0x60] sm:$0xff]
    %v799 = vld [vmem:[#allocation9 + $0x68] sm:$0xff]
    %v800 = vld [vmem:[#allocation9 + $0x70] sm:$0xff]
    %v801 = vld [vmem:[#allocation9 + $0x78] sm:$0xff]
    %v802 = vld [vmem:[%s6] sm:$0x1]
    %v804 = vlaneseq
    %v805 = vshrl.u32 %v804, 7
    %v806 = vsub.s32 0, %v805
    %v807 = vrot.slane %v802, %v806
    %809 = vmatprep.subr.mxu0 0.0
    %810 = vmatpush1.msra.mxu0 %v801
    %811 = vmatprep.subr.mxu0 0.0
    %812 = vmatpush1.msra.mxu0 %v800
    %813 = vmatprep.subr.mxu0 0.0
    %814 = vmatpush1.msra.mxu0 %v799
    %815 = vmatprep.subr.mxu0 0.0
    %816 = vmatpush1.msra.mxu0 %v798
    %817 = vmatprep.subr.mxu0 0.0
    %818 = vmatpush1.msra.mxu0 %v797
    %819 = vmatprep.subr.mxu0 0.0
    %820 = vmatpush1.msra.mxu0 %v796
    %821 = vmatprep.subr.mxu0 0.0
    %822 = vmatpush1.msra.mxu0 %v795
    %823 = vmatprep.subr.mxu0 0.0
    %824 = vmatpush1.msra.mxu0 %v794
    %825 = vmatprep.subr.mxu0 0.0
    %826 = vmatpush1.msra.mxu0 %v793
    %827 = vmatprep.subr.mxu0 0.0
    %828 = vmatpush1.msra.mxu0 %v792
    %829 = vmatprep.subr.mxu0 0.0
    %830 = vmatpush1.msra.mxu0 %v791
    %831 = vmatprep.subr.mxu0 0.0
    %832 = vmatpush1.msra.mxu0 %v790
    %833 = vmatprep.subr.mxu0 0.0
    %834 = vmatpush1.msra.mxu0 %v789
    %835 = vmatprep.subr.mxu0 0.0
    %836 = vmatpush1.msra.mxu0 %v788
    %837 = vmatprep.subr.mxu0 0.0
    %838 = vmatpush1.msra.mxu0 %v787
    %839 = vmatprep.subr.mxu0 0.0
    %840 = vmatpush1.msra.mxu0 %v786
    %841 = vmatprep.subr.mxu0 0.0
    %842 = vmatpush2.msra.mxu0 0.0
    %843 = vmatprep.subr.mxu0 0.0
    %844 = vmatpush2.msra.mxu0 0.0
    %845 = vmatprep.subr.mxu0 0.0
    %846 = vmatpush2.msra.mxu0 0.0
    %847 = vmatprep.subr.mxu0 0.0
    %848 = vmatpush2.msra.mxu0 0.0
    %849 = vmatprep.subr.mxu0 0.0
    %850 = vmatpush2.msra.mxu0 0.0
    %851 = vmatprep.subr.mxu0 0.0
    %852 = vmatpush2.msra.mxu0 0.0
    %853 = vmatprep.subr.mxu0 0.0
    %854 = vmatpush2.msra.mxu0 0.0
    %855 = vmatprep.subr.mxu0 0.0
    %856 = vmatpush2.msra.mxu0 0.0
    %857 = vmatprep.subr.mxu0 0.0
    %858 = vmatpush2.msra.mxu0 0.0
    %859 = vmatprep.subr.mxu0 0.0
    %860 = vmatpush2.msra.mxu0 0.0
    %861 = vmatprep.subr.mxu0 0.0
    %862 = vmatpush2.msra.mxu0 0.0
    %863 = vmatprep.subr.mxu0 0.0
    %864 = vmatpush2.msra.mxu0 0.0
    %865 = vmatprep.subr.mxu0 0.0
    %866 = vmatpush2.msra.mxu0 0.0
    %867 = vmatprep.subr.mxu0 0.0
    %868 = vmatpush2.msra.mxu0 0.0
    %869 = vmatprep.subr.mxu0 0.0
    %870 = vmatpush2.msra.mxu0 0.0
    %871 = vmatprep.subr.mxu0 0.0
    %872 = vmatpush2.msra.mxu0 0.0
    %873 = vmatprep.mubr.f32.mxu0 0.0
    %874 = vmatmul.mubr.f32.gmra.mxu0 %v785
    %v875 = vpop.f32.mrf.mxu0
    %v876 = vadd.f32 %v807, %v875
    %v877 = vpop.f32.mrf.mxu0
    %878 = vdwg.mxu0
    %879 = vst [vmem:[#allocation11] sm:$0xff] %v876
    // Predicated region
    $region46: #{tpu_custom_call.1} parent=1 // pred_check
      _
    $region47: #{tpu_custom_call.1} parent=1 // pred_check_branch
      %881 = sbr.rel (0) target = $region49
    $region48: #{tpu_custom_call.1} parent=1 // pred_region
      %s883 = ssub.s32 128, 128
      %884 = vsyncadd [#allocation5], %s883
      %s886 = sshll.u32 [#allocation11], 4
      %s887 = int_to_ptr.vmem [resolvable:$true] %s886
      %889 = dma.vmem_to_hbm [thread:$0]  %s887, 128, %s7, [#allocation5]
    $region49: #{tpu_custom_call.1} parent=1 // pred_fallthru
      _
    // Predicated region
    $region50: #{tpu_custom_call.1} parent=1 // pred_check
      _
    $region51: #{tpu_custom_call.1} parent=1 // pred_check_branch
      %891 = sbr.rel (0) target = $region53
    $region52: #{tpu_custom_call.1} parent=1 // pred_region
      %892 = dma.done [#allocation5], 128
    $region53: #{tpu_custom_call.1} parent=1 // pred_fallthru
      _
    %893 = vsyncpa [#allocation4], 1
    %894 = vsyncpa [#allocation7], 1
    %895 = vsyncpa [#allocation10], 1
    %896 = vsyncpa [#allocation5], 1

</llo_original>
